<compile_context>
chip_gen: v5e
topology: v5e:2x2
jax: 0.10.0
libtpu: 0.0.40
codegen_flags: <defaults>
</compile_context>

<pallas_src>
import functools
import math

import jax
import jax.numpy as jnp
from jax.experimental import pallas as pl
from jax.experimental.pallas import tpu as pltpu


def _mha_kernel(xq_ref, xk_ref, xv_ref, mask_ref,
                wq_ref, bq_ref, wk_ref, bk_ref, wv_ref, bv_ref, wo_ref, bo_ref,
                o_ref, *, h, d_k, scale):
    # Blocks: x*_ref (1, S, D); mask_ref (1, S, S) int32; w*_ref (D, D)
    # pre-transposed to (in, out); b*_ref (1, D); o_ref (1, S, D).
    xq = xq_ref[0].astype(jnp.float32)          # (S, D)
    xk = xk_ref[0].astype(jnp.float32)
    xv = xv_ref[0].astype(jnp.float32)
    neg_mask = mask_ref[0] == 0                 # (S, S) bool, hoisted out of head loop

    wq = wq_ref[...].astype(jnp.float32)        # (D, D)
    wk = wk_ref[...].astype(jnp.float32)
    wv = wv_ref[...].astype(jnp.float32)
    wo = wo_ref[...].astype(jnp.float32)

    bq = bq_ref[...].astype(jnp.float32)        # (1, D)
    bk = bk_ref[...].astype(jnp.float32)
    bv = bv_ref[...].astype(jnp.float32)
    bo = bo_ref[...].astype(jnp.float32)

    # Q/K/V projections (nn.Linear: x @ W.T + b; W.T supplied by the wrapper).
    # Pre-scale Q by 1/sqrt(d_k) so per-head scores need no extra multiply.
    q = (jnp.dot(xq, wq, preferred_element_type=jnp.float32) + bq) * jnp.float32(scale)
    k = jnp.dot(xk, wk, preferred_element_type=jnp.float32) + bk
    v = jnp.dot(xv, wv, preferred_element_type=jnp.float32) + bv

    heads = []
    for i in range(h):                          # static head loop (tiny h)
        lo, hi = i * d_k, (i + 1) * d_k
        qh = q[:, lo:hi]                        # (S, d_k)
        kh = k[:, lo:hi]
        vh = v[:, lo:hi]

        # scores = (q / sqrt(d_k)) @ k^T
        scores = jnp.einsum('qd,kd->qk', qh, kh,
                            preferred_element_type=jnp.float32)
        scores = jnp.where(neg_mask, jnp.float32(-1e9), scores)

        # numerically stable softmax
        m = jnp.max(scores, axis=-1, keepdims=True)
        e = jnp.exp(scores - m)
        denom = jnp.sum(e, axis=-1, keepdims=True)
        p = e / denom

        heads.append(jnp.dot(p, vh, preferred_element_type=jnp.float32))  # (S, d_k)

    # Concatenate heads along features, then one fused output projection.
    attn = jnp.concatenate(heads, axis=-1)      # (S, D)
    out = jnp.dot(attn, wo, preferred_element_type=jnp.float32) + bo
    o_ref[0] = out.astype(o_ref.dtype)


def multihead_attention_pallas(xq, xk, xv, mask, params, h):
    """xq/xk/xv: (B, S, D); mask: (1, S, S) int32; params: dict of torch-layout
    Linear weights ((D, D), stored as out x in) and biases ((D,))."""
    B, S, D = xq.shape
    assert D % h == 0
    d_k = D // h
    scale = 1.0 / math.sqrt(d_k)

    # Pre-transpose weights so the kernel computes x @ W (MXU-friendly) and
    # reshape biases to (1, D) so the kernel can broadcast-add along rows.
    wq_t = params['wq'].T
    wk_t = params['wk'].T
    wv_t = params['wv'].T
    wo_t = params['wo'].T
    bq = params['bq'].reshape(1, D)
    bk = params['bk'].reshape(1, D)
    bv = params['bv'].reshape(1, D)
    bo = params['bo'].reshape(1, D)

    kernel = functools.partial(_mha_kernel, h=h, d_k=d_k, scale=scale)

    full2 = lambda b: (0, 0)
    full3 = lambda b: (0, 0, 0)
    batch3 = lambda b: (b, 0, 0)

    # Advisory cost estimate (helps XLA schedule around the fused kernel).
    flops = B * (4 * 2 * S * D * D + h * (2 * 2 * S * S * d_k))
    transcendentals = B * h * S * S
    bytes_accessed = 4 * (4 * B * S * D + 4 * D * D + 4 * D + S * S)
    cost = pl.CostEstimate(flops=flops,
                           transcendentals=transcendentals,
                           bytes_accessed=bytes_accessed)

    out = pl.pallas_call(
        kernel,
        out_shape=jax.ShapeDtypeStruct((B, S, D), xq.dtype),
        grid_spec=pltpu.PrefetchScalarGridSpec(
            num_scalar_prefetch=0,
            grid=(B,),
            in_specs=[
                pl.BlockSpec((1, S, D), batch3),   # xq
                pl.BlockSpec((1, S, D), batch3),   # xk
                pl.BlockSpec((1, S, D), batch3),   # xv
                pl.BlockSpec((1, S, S), full3),    # mask (broadcast over batch)
                pl.BlockSpec((D, D), full2),       # Wq^T
                pl.BlockSpec((1, D), full2),       # bq
                pl.BlockSpec((D, D), full2),       # Wk^T
                pl.BlockSpec((1, D), full2),       # bk
                pl.BlockSpec((D, D), full2),       # Wv^T
                pl.BlockSpec((1, D), full2),       # bv
                pl.BlockSpec((D, D), full2),       # Wo^T
                pl.BlockSpec((1, D), full2),       # bo
            ],
            out_specs=pl.BlockSpec((1, S, D), batch3),
        ),
        compiler_params=pltpu.CompilerParams(
            dimension_semantics=("parallel",),
        ),
        cost_estimate=cost,
    )(xq, xk, xv, mask, wq_t, bq, wk_t, bk, wv_t, bv, wo_t, bo)

    return out


def multihead_attention_ref(xq, xk, xv, mask, params, h):
    """Pure-JAX reference matching the PyTorch module (eval mode)."""
    B, S, D = xq.shape
    d_k = D // h

    def linear(x, w, b):
        return jnp.einsum('bsd,od->bso', x.astype(jnp.float32),
                          w.astype(jnp.float32)) + b.astype(jnp.float32)

    q = linear(xq, params['wq'], params['bq'])
    k = linear(xk, params['wk'], params['bk'])
    v = linear(xv, params['wv'], params['bv'])

    def split_heads(t):
        return t.reshape(B, S, h, d_k).transpose(0, 2, 1, 3)   # (B, h, S, d_k)

    q, k, v = split_heads(q), split_heads(k), split_heads(v)
    scores = jnp.einsum('bhqd,bhkd->bhqk', q, k) / math.sqrt(d_k)
    m = mask[:, None, :, :]                                    # (1, 1, S, S)
    scores = jnp.where(m == 0, -1e9, scores)
    p = jax.nn.softmax(scores, axis=-1)
    x = jnp.einsum('bhqk,bhkd->bhqd', p, v)
    x = x.transpose(0, 2, 1, 3).reshape(B, S, D)
    out = jnp.einsum('bsd,od->bso', x, params['wo'].astype(jnp.float32)) \
        + params['bo'].astype(jnp.float32)
    return out.astype(xq.dtype)


if __name__ == "__main__":
    key = jax.random.PRNGKey(0)
    batch, seq, d_model, n_heads = 2, 8, 32, 4

    keys = jax.random.split(key, 12)
    xq = jax.random.normal(keys[0], (batch, seq, d_model), dtype=jnp.float32)
    xk = jax.random.normal(keys[1], (batch, seq, d_model), dtype=jnp.float32)
    xv = jax.random.normal(keys[2], (batch, seq, d_model), dtype=jnp.float32)

    # Causal (tril) mask, as in the reference tril_mask().
    mask = jnp.tril(jnp.ones((1, seq, seq), dtype=jnp.int32))

    # Deterministic Linear params (torch layout: W is (out, in)).
    def mk_w(k):
        return 0.1 * jax.random.normal(k, (d_model, d_model), dtype=jnp.float32)

    def mk_b(k):
        return 0.1 * jax.random.normal(k, (d_model,), dtype=jnp.float32)

    params = {
        'wq': mk_w(keys[3]), 'bq': mk_b(keys[4]),
        'wk': mk_w(keys[5]), 'bk': mk_b(keys[6]),
        'wv': mk_w(keys[7]), 'bv': mk_b(keys[8]),
        'wo': mk_w(keys[9]), 'bo': mk_b(keys[10]),
    }

    out = multihead_attention_pallas(xq, xk, xv, mask, params, n_heads)
    jax.block_until_ready(out)

    ref = multihead_attention_ref(xq, xk, xv, mask, params, n_heads)
    assert out.shape == (batch, seq, d_model)
    assert jnp.allclose(out, ref, atol=1e-4, rtol=1e-4), "mismatch vs reference"

    print("KERNEL_OK")
</pallas_src>

<mosaic_0001>
module attributes {stable_mosaic.version = 11 : i64} {
  func.func @_mha_kernel(%arg0: i32, %arg1: memref<1x8x32xf32, #tpu.memory_space<vmem>>, %arg2: memref<1x8x32xf32, #tpu.memory_space<vmem>>, %arg3: memref<1x8x32xf32, #tpu.memory_space<vmem>>, %arg4: memref<1x8x8xi32, #tpu.memory_space<vmem>>, %arg5: memref<32x32xf32, #tpu.memory_space<vmem>>, %arg6: memref<1x32xf32, #tpu.memory_space<vmem>>, %arg7: memref<32x32xf32, #tpu.memory_space<vmem>>, %arg8: memref<1x32xf32, #tpu.memory_space<vmem>>, %arg9: memref<32x32xf32, #tpu.memory_space<vmem>>, %arg10: memref<1x32xf32, #tpu.memory_space<vmem>>, %arg11: memref<32x32xf32, #tpu.memory_space<vmem>>, %arg12: memref<1x32xf32, #tpu.memory_space<vmem>>, %arg13: memref<1x8x32xf32, #tpu.memory_space<vmem>>) attributes {dimension_semantics = [#tpu.dimension_semantics<parallel>], iteration_bounds = array<i64: 2>, scalar_prefetch = 0 : i64, scratch_operands = 0 : i64, tpu.core_type = #tpu.core_type<tc>, window_params = [{transform_indices = @transform_0, window_bounds = array<i64: 1, 8, 32>}, {transform_indices = @transform_1, window_bounds = array<i64: 1, 8, 32>}, {transform_indices = @transform_2, window_bounds = array<i64: 1, 8, 32>}, {pipeline_mode = #tpu.pipeline_mode<synchronous>, transform_indices = @transform_3, window_bounds = array<i64: 1, 8, 8>}, {pipeline_mode = #tpu.pipeline_mode<synchronous>, transform_indices = @transform_4, window_bounds = array<i64: 32, 32>}, {pipeline_mode = #tpu.pipeline_mode<synchronous>, transform_indices = @transform_5, window_bounds = array<i64: 1, 32>}, {pipeline_mode = #tpu.pipeline_mode<synchronous>, transform_indices = @transform_6, window_bounds = array<i64: 32, 32>}, {pipeline_mode = #tpu.pipeline_mode<synchronous>, transform_indices = @transform_7, window_bounds = array<i64: 1, 32>}, {pipeline_mode = #tpu.pipeline_mode<synchronous>, transform_indices = @transform_8, window_bounds = array<i64: 32, 32>}, {pipeline_mode = #tpu.pipeline_mode<synchronous>, transform_indices = @transform_9, window_bounds = array<i64: 1, 32>}, {pipeline_mode = #tpu.pipeline_mode<synchronous>, transform_indices = @transform_10, window_bounds = array<i64: 32, 32>}, {pipeline_mode = #tpu.pipeline_mode<synchronous>, transform_indices = @transform_11, window_bounds = array<i64: 1, 32>}, {transform_indices = @transform_12, window_bounds = array<i64: 1, 8, 32>}]} {
    %c0 = arith.constant 0 : index
    %c0_0 = arith.constant 0 : index
    %c0_1 = arith.constant 0 : index
    %0 = vector.load %arg1[%c0, %c0_0, %c0_1] : memref<1x8x32xf32, #tpu.memory_space<vmem>>, vector<1x8x32xf32>
    %1 = vector.shape_cast %0 : vector<1x8x32xf32> to vector<8x32xf32>
    %c0_2 = arith.constant 0 : index
    %c0_3 = arith.constant 0 : index
    %c0_4 = arith.constant 0 : index
    %2 = vector.load %arg2[%c0_2, %c0_3, %c0_4] : memref<1x8x32xf32, #tpu.memory_space<vmem>>, vector<1x8x32xf32>
    %3 = vector.shape_cast %2 : vector<1x8x32xf32> to vector<8x32xf32>
    %c0_5 = arith.constant 0 : index
    %c0_6 = arith.constant 0 : index
    %c0_7 = arith.constant 0 : index
    %4 = vector.load %arg3[%c0_5, %c0_6, %c0_7] : memref<1x8x32xf32, #tpu.memory_space<vmem>>, vector<1x8x32xf32>
    %5 = vector.shape_cast %4 : vector<1x8x32xf32> to vector<8x32xf32>
    %c0_8 = arith.constant 0 : index
    %c0_9 = arith.constant 0 : index
    %c0_10 = arith.constant 0 : index
    %6 = vector.load %arg4[%c0_8, %c0_9, %c0_10] : memref<1x8x8xi32, #tpu.memory_space<vmem>>, vector<1x8x8xi32>
    %7 = vector.shape_cast %6 : vector<1x8x8xi32> to vector<8x8xi32>
    %c0_i32 = arith.constant 0 : i32
    %8 = vector.broadcast %c0_i32 : i32 to vector<8x8xi32>
    %9 = arith.cmpi eq, %7, %8 : vector<8x8xi32>
    %c0_11 = arith.constant 0 : index
    %c0_12 = arith.constant 0 : index
    %10 = vector.load %arg5[%c0_11, %c0_12] : memref<32x32xf32, #tpu.memory_space<vmem>>, vector<32x32xf32>
    %c0_13 = arith.constant 0 : index
    %c0_14 = arith.constant 0 : index
    %11 = vector.load %arg7[%c0_13, %c0_14] : memref<32x32xf32, #tpu.memory_space<vmem>>, vector<32x32xf32>
    %c0_15 = arith.constant 0 : index
    %c0_16 = arith.constant 0 : index
    %12 = vector.load %arg9[%c0_15, %c0_16] : memref<32x32xf32, #tpu.memory_space<vmem>>, vector<32x32xf32>
    %c0_17 = arith.constant 0 : index
    %c0_18 = arith.constant 0 : index
    %13 = vector.load %arg11[%c0_17, %c0_18] : memref<32x32xf32, #tpu.memory_space<vmem>>, vector<32x32xf32>
    %c0_19 = arith.constant 0 : index
    %c0_20 = arith.constant 0 : index
    %14 = vector.load %arg6[%c0_19, %c0_20] : memref<1x32xf32, #tpu.memory_space<vmem>>, vector<1x32xf32>
    %c0_21 = arith.constant 0 : index
    %c0_22 = arith.constant 0 : index
    %15 = vector.load %arg8[%c0_21, %c0_22] : memref<1x32xf32, #tpu.memory_space<vmem>>, vector<1x32xf32>
    %c0_23 = arith.constant 0 : index
    %c0_24 = arith.constant 0 : index
    %16 = vector.load %arg10[%c0_23, %c0_24] : memref<1x32xf32, #tpu.memory_space<vmem>>, vector<1x32xf32>
    %c0_25 = arith.constant 0 : index
    %c0_26 = arith.constant 0 : index
    %17 = vector.load %arg12[%c0_25, %c0_26] : memref<1x32xf32, #tpu.memory_space<vmem>>, vector<1x32xf32>
    %cst = arith.constant dense<0.000000e+00> : vector<8x32xf32>
    %18 = tpu.matmul %1, %10, %cst {dimension_numbers = #tpu.dot_dimension_numbers<[1], [0], [0], [1], [0, 0, 1, 1], [], []>} : vector<8x32xf32>, vector<32x32xf32>, vector<8x32xf32> -> vector<8x32xf32>
    %19 = vector.broadcast %14 : vector<1x32xf32> to vector<8x32xf32>
    %20 = arith.addf %18, %19 : vector<8x32xf32>
    %cst_27 = arith.constant 0.353553385 : f32
    %21 = vector.broadcast %cst_27 : f32 to vector<8x32xf32>
    %22 = arith.mulf %20, %21 : vector<8x32xf32>
    %cst_28 = arith.constant dense<0.000000e+00> : vector<8x32xf32>
    %23 = tpu.matmul %3, %11, %cst_28 {dimension_numbers = #tpu.dot_dimension_numbers<[1], [0], [0], [1], [0, 0, 1, 1], [], []>} : vector<8x32xf32>, vector<32x32xf32>, vector<8x32xf32> -> vector<8x32xf32>
    %24 = vector.broadcast %15 : vector<1x32xf32> to vector<8x32xf32>
    %25 = arith.addf %23, %24 : vector<8x32xf32>
    %cst_29 = arith.constant dense<0.000000e+00> : vector<8x32xf32>
    %26 = tpu.matmul %5, %12, %cst_29 {dimension_numbers = #tpu.dot_dimension_numbers<[1], [0], [0], [1], [0, 0, 1, 1], [], []>} : vector<8x32xf32>, vector<32x32xf32>, vector<8x32xf32> -> vector<8x32xf32>
    %27 = vector.broadcast %16 : vector<1x32xf32> to vector<8x32xf32>
    %28 = arith.addf %26, %27 : vector<8x32xf32>
    %29 = vector.extract_strided_slice %22 {offsets = [0, 0], sizes = [8, 8], strides = [1, 1]} : vector<8x32xf32> to vector<8x8xf32>
    %30 = vector.extract_strided_slice %25 {offsets = [0, 0], sizes = [8, 8], strides = [1, 1]} : vector<8x32xf32> to vector<8x8xf32>
    %31 = vector.extract_strided_slice %28 {offsets = [0, 0], sizes = [8, 8], strides = [1, 1]} : vector<8x32xf32> to vector<8x8xf32>
    "tpu.trace_start"() <{level = 10 : i32, message = "qd,kd->qk"}> : () -> ()
    %cst_30 = arith.constant dense<0.000000e+00> : vector<8x8xf32>
    %32 = tpu.matmul %29, %30, %cst_30 {dimension_numbers = #tpu.dot_dimension_numbers<[1], [1], [0], [0], [0, 0, 1, 0], [], []>} : vector<8x8xf32>, vector<8x8xf32>, vector<8x8xf32> -> vector<8x8xf32>
    %cst_31 = arith.constant -1.000000e+09 : f32
    "tpu.trace_stop"() : () -> ()
    %33 = vector.broadcast %cst_31 : f32 to vector<8x8xf32>
    %34 = arith.select %9, %33, %32 : vector<8x8xi1>, vector<8x8xf32>
    %cst_32 = arith.constant dense<0xFF800000> : vector<8xf32>
    %35 = vector.multi_reduction <maximumf>, %34, %cst_32 [1] : vector<8x8xf32> to vector<8xf32>
    %36 = vector.shape_cast %35 : vector<8xf32> to vector<8x1xf32>
    %37 = vector.broadcast %36 : vector<8x1xf32> to vector<8x8xf32>
    %38 = arith.subf %34, %37 : vector<8x8xf32>
    %39 = math.exp %38 : vector<8x8xf32>
    %cst_33 = arith.constant dense<0.000000e+00> : vector<8xf32>
    %40 = vector.multi_reduction <add>, %39, %cst_33 [1] : vector<8x8xf32> to vector<8xf32>
    %41 = vector.shape_cast %40 : vector<8xf32> to vector<8x1xf32>
    %42 = vector.broadcast %41 : vector<8x1xf32> to vector<8x8xf32>
    %43 = arith.divf %39, %42 : vector<8x8xf32>
    %cst_34 = arith.constant dense<0.000000e+00> : vector<8x8xf32>
    %44 = tpu.matmul %43, %31, %cst_34 {dimension_numbers = #tpu.dot_dimension_numbers<[1], [0], [0], [1], [0, 0, 1, 1], [], []>} : vector<8x8xf32>, vector<8x8xf32>, vector<8x8xf32> -> vector<8x8xf32>
    %45 = vector.extract_strided_slice %22 {offsets = [0, 8], sizes = [8, 8], strides = [1, 1]} : vector<8x32xf32> to vector<8x8xf32>
    %46 = vector.extract_strided_slice %25 {offsets = [0, 8], sizes = [8, 8], strides = [1, 1]} : vector<8x32xf32> to vector<8x8xf32>
    %47 = vector.extract_strided_slice %28 {offsets = [0, 8], sizes = [8, 8], strides = [1, 1]} : vector<8x32xf32> to vector<8x8xf32>
    "tpu.trace_start"() <{level = 10 : i32, message = "qd,kd->qk"}> : () -> ()
    %cst_35 = arith.constant dense<0.000000e+00> : vector<8x8xf32>
    %48 = tpu.matmul %45, %46, %cst_35 {dimension_numbers = #tpu.dot_dimension_numbers<[1], [1], [0], [0], [0, 0, 1, 0], [], []>} : vector<8x8xf32>, vector<8x8xf32>, vector<8x8xf32> -> vector<8x8xf32>
    %cst_36 = arith.constant -1.000000e+09 : f32
    "tpu.trace_stop"() : () -> ()
    %49 = vector.broadcast %cst_36 : f32 to vector<8x8xf32>
    %50 = arith.select %9, %49, %48 : vector<8x8xi1>, vector<8x8xf32>
    %cst_37 = arith.constant dense<0xFF800000> : vector<8xf32>
    %51 = vector.multi_reduction <maximumf>, %50, %cst_37 [1] : vector<8x8xf32> to vector<8xf32>
    %52 = vector.shape_cast %51 : vector<8xf32> to vector<8x1xf32>
    %53 = vector.broadcast %52 : vector<8x1xf32> to vector<8x8xf32>
    %54 = arith.subf %50, %53 : vector<8x8xf32>
    %55 = math.exp %54 : vector<8x8xf32>
    %cst_38 = arith.constant dense<0.000000e+00> : vector<8xf32>
    %56 = vector.multi_reduction <add>, %55, %cst_38 [1] : vector<8x8xf32> to vector<8xf32>
    %57 = vector.shape_cast %56 : vector<8xf32> to vector<8x1xf32>
    %58 = vector.broadcast %57 : vector<8x1xf32> to vector<8x8xf32>
    %59 = arith.divf %55, %58 : vector<8x8xf32>
    %cst_39 = arith.constant dense<0.000000e+00> : vector<8x8xf32>
    %60 = tpu.matmul %59, %47, %cst_39 {dimension_numbers = #tpu.dot_dimension_numbers<[1], [0], [0], [1], [0, 0, 1, 1], [], []>} : vector<8x8xf32>, vector<8x8xf32>, vector<8x8xf32> -> vector<8x8xf32>
    %61 = vector.extract_strided_slice %22 {offsets = [0, 16], sizes = [8, 8], strides = [1, 1]} : vector<8x32xf32> to vector<8x8xf32>
    %62 = vector.extract_strided_slice %25 {offsets = [0, 16], sizes = [8, 8], strides = [1, 1]} : vector<8x32xf32> to vector<8x8xf32>
    %63 = vector.extract_strided_slice %28 {offsets = [0, 16], sizes = [8, 8], strides = [1, 1]} : vector<8x32xf32> to vector<8x8xf32>
    "tpu.trace_start"() <{level = 10 : i32, message = "qd,kd->qk"}> : () -> ()
    %cst_40 = arith.constant dense<0.000000e+00> : vector<8x8xf32>
    %64 = tpu.matmul %61, %62, %cst_40 {dimension_numbers = #tpu.dot_dimension_numbers<[1], [1], [0], [0], [0, 0, 1, 0], [], []>} : vector<8x8xf32>, vector<8x8xf32>, vector<8x8xf32> -> vector<8x8xf32>
    %cst_41 = arith.constant -1.000000e+09 : f32
    "tpu.trace_stop"() : () -> ()
    %65 = vector.broadcast %cst_41 : f32 to vector<8x8xf32>
    %66 = arith.select %9, %65, %64 : vector<8x8xi1>, vector<8x8xf32>
    %cst_42 = arith.constant dense<0xFF800000> : vector<8xf32>
    %67 = vector.multi_reduction <maximumf>, %66, %cst_42 [1] : vector<8x8xf32> to vector<8xf32>
    %68 = vector.shape_cast %67 : vector<8xf32> to vector<8x1xf32>
    %69 = vector.broadcast %68 : vector<8x1xf32> to vector<8x8xf32>
    %70 = arith.subf %66, %69 : vector<8x8xf32>
    %71 = math.exp %70 : vector<8x8xf32>
    %cst_43 = arith.constant dense<0.000000e+00> : vector<8xf32>
    %72 = vector.multi_reduction <add>, %71, %cst_43 [1] : vector<8x8xf32> to vector<8xf32>
    %73 = vector.shape_cast %72 : vector<8xf32> to vector<8x1xf32>
    %74 = vector.broadcast %73 : vector<8x1xf32> to vector<8x8xf32>
    %75 = arith.divf %71, %74 : vector<8x8xf32>
    %cst_44 = arith.constant dense<0.000000e+00> : vector<8x8xf32>
    %76 = tpu.matmul %75, %63, %cst_44 {dimension_numbers = #tpu.dot_dimension_numbers<[1], [0], [0], [1], [0, 0, 1, 1], [], []>} : vector<8x8xf32>, vector<8x8xf32>, vector<8x8xf32> -> vector<8x8xf32>
    %77 = vector.extract_strided_slice %22 {offsets = [0, 24], sizes = [8, 8], strides = [1, 1]} : vector<8x32xf32> to vector<8x8xf32>
    %78 = vector.extract_strided_slice %25 {offsets = [0, 24], sizes = [8, 8], strides = [1, 1]} : vector<8x32xf32> to vector<8x8xf32>
    %79 = vector.extract_strided_slice %28 {offsets = [0, 24], sizes = [8, 8], strides = [1, 1]} : vector<8x32xf32> to vector<8x8xf32>
    "tpu.trace_start"() <{level = 10 : i32, message = "qd,kd->qk"}> : () -> ()
    %cst_45 = arith.constant dense<0.000000e+00> : vector<8x8xf32>
    %80 = tpu.matmul %77, %78, %cst_45 {dimension_numbers = #tpu.dot_dimension_numbers<[1], [1], [0], [0], [0, 0, 1, 0], [], []>} : vector<8x8xf32>, vector<8x8xf32>, vector<8x8xf32> -> vector<8x8xf32>
    %cst_46 = arith.constant -1.000000e+09 : f32
    "tpu.trace_stop"() : () -> ()
    %81 = vector.broadcast %cst_46 : f32 to vector<8x8xf32>
    %82 = arith.select %9, %81, %80 : vector<8x8xi1>, vector<8x8xf32>
    %cst_47 = arith.constant dense<0xFF800000> : vector<8xf32>
    %83 = vector.multi_reduction <maximumf>, %82, %cst_47 [1] : vector<8x8xf32> to vector<8xf32>
    %84 = vector.shape_cast %83 : vector<8xf32> to vector<8x1xf32>
    %85 = vector.broadcast %84 : vector<8x1xf32> to vector<8x8xf32>
    %86 = arith.subf %82, %85 : vector<8x8xf32>
    %87 = math.exp %86 : vector<8x8xf32>
    %cst_48 = arith.constant dense<0.000000e+00> : vector<8xf32>
    %88 = vector.multi_reduction <add>, %87, %cst_48 [1] : vector<8x8xf32> to vector<8xf32>
    %89 = vector.shape_cast %88 : vector<8xf32> to vector<8x1xf32>
    %90 = vector.broadcast %89 : vector<8x1xf32> to vector<8x8xf32>
    %91 = arith.divf %87, %90 : vector<8x8xf32>
    %cst_49 = arith.constant dense<0.000000e+00> : vector<8x8xf32>
    %92 = tpu.matmul %91, %79, %cst_49 {dimension_numbers = #tpu.dot_dimension_numbers<[1], [0], [0], [1], [0, 0, 1, 1], [], []>} : vector<8x8xf32>, vector<8x8xf32>, vector<8x8xf32> -> vector<8x8xf32>
    %93 = tpu.concatenate %44, %60, %76, %92 in 1 : vector<8x8xf32>, vector<8x8xf32>, vector<8x8xf32>, vector<8x8xf32> -> vector<8x32xf32>
    %cst_50 = arith.constant dense<0.000000e+00> : vector<8x32xf32>
    %94 = tpu.matmul %93, %13, %cst_50 {dimension_numbers = #tpu.dot_dimension_numbers<[1], [0], [0], [1], [0, 0, 1, 1], [], []>} : vector<8x32xf32>, vector<32x32xf32>, vector<8x32xf32> -> vector<8x32xf32>
    %95 = vector.broadcast %17 : vector<1x32xf32> to vector<8x32xf32>
    %96 = arith.addf %94, %95 : vector<8x32xf32>
    %c0_51 = arith.constant 0 : index
    %c0_52 = arith.constant 0 : index
    %c0_53 = arith.constant 0 : index
    %97 = vector.load %arg13[%c0_51, %c0_52, %c0_53] : memref<1x8x32xf32, #tpu.memory_space<vmem>>, vector<1x8x32xf32>
    %98 = vector.shape_cast %97 : vector<1x8x32xf32> to vector<8x32xf32>
    %99 = vector.shape_cast %96 : vector<8x32xf32> to vector<1x8x32xf32>
    tpu.vector_store %arg13[%c0_51, %c0_52, %c0_53], %99 {strides = array<i32>} : memref<1x8x32xf32, #tpu.memory_space<vmem>>, vector<1x8x32xf32>,
    return
  }
  func.func @transform_0(%arg0: i32) -> (i32, i32, i32) {
    %c0_i32 = arith.constant 0 : i32
    %c0_i32_0 = arith.constant 0 : i32
    %c0_i32_1 = arith.constant 0 : i32
    return %arg0, %c0_i32, %c0_i32_0 : i32, i32, i32
  }
  func.func @transform_1(%arg0: i32) -> (i32, i32, i32) {
    %c0_i32 = arith.constant 0 : i32
    %c0_i32_0 = arith.constant 0 : i32
    %c0_i32_1 = arith.constant 0 : i32
    return %arg0, %c0_i32, %c0_i32_0 : i32, i32, i32
  }
  func.func @transform_2(%arg0: i32) -> (i32, i32, i32) {
    %c0_i32 = arith.constant 0 : i32
    %c0_i32_0 = arith.constant 0 : i32
    %c0_i32_1 = arith.constant 0 : i32
    return %arg0, %c0_i32, %c0_i32_0 : i32, i32, i32
  }
  func.func @transform_3(%arg0: i32) -> (i32, i32, i32) {
    %c0_i32 = arith.constant 0 : i32
    %c0_i32_0 = arith.constant 0 : i32
    %c0_i32_1 = arith.constant 0 : i32
    %c0_i32_2 = arith.constant 0 : i32
    return %c0_i32, %c0_i32_0, %c0_i32_1 : i32, i32, i32
  }
  func.func @transform_4(%arg0: i32) -> (i32, i32) {
    %c0_i32 = arith.constant 0 : i32
    %c0_i32_0 = arith.constant 0 : i32
    %c0_i32_1 = arith.constant 0 : i32
    return %c0_i32, %c0_i32_0 : i32, i32
  }
  func.func @transform_5(%arg0: i32) -> (i32, i32) {
    %c0_i32 = arith.constant 0 : i32
    %c0_i32_0 = arith.constant 0 : i32
    %c0_i32_1 = arith.constant 0 : i32
    return %c0_i32, %c0_i32_0 : i32, i32
  }
  func.func @transform_6(%arg0: i32) -> (i32, i32) {
    %c0_i32 = arith.constant 0 : i32
    %c0_i32_0 = arith.constant 0 : i32
    %c0_i32_1 = arith.constant 0 : i32
    return %c0_i32, %c0_i32_0 : i32, i32
  }
  func.func @transform_7(%arg0: i32) -> (i32, i32) {
    %c0_i32 = arith.constant 0 : i32
    %c0_i32_0 = arith.constant 0 : i32
    %c0_i32_1 = arith.constant 0 : i32
    return %c0_i32, %c0_i32_0 : i32, i32
  }
  func.func @transform_8(%arg0: i32) -> (i32, i32) {
    %c0_i32 = arith.constant 0 : i32
    %c0_i32_0 = arith.constant 0 : i32
    %c0_i32_1 = arith.constant 0 : i32
    return %c0_i32, %c0_i32_0 : i32, i32
  }
  func.func @transform_9(%arg0: i32) -> (i32, i32) {
    %c0_i32 = arith.constant 0 : i32
    %c0_i32_0 = arith.constant 0 : i32
    %c0_i32_1 = arith.constant 0 : i32
    return %c0_i32, %c0_i32_0 : i32, i32
  }
  func.func @transform_10(%arg0: i32) -> (i32, i32) {
    %c0_i32 = arith.constant 0 : i32
    %c0_i32_0 = arith.constant 0 : i32
    %c0_i32_1 = arith.constant 0 : i32
    return %c0_i32, %c0_i32_0 : i32, i32
  }
  func.func @transform_11(%arg0: i32) -> (i32, i32) {
    %c0_i32 = arith.constant 0 : i32
    %c0_i32_0 = arith.constant 0 : i32
    %c0_i32_1 = arith.constant 0 : i32
    return %c0_i32, %c0_i32_0 : i32, i32
  }
  func.func @transform_12(%arg0: i32) -> (i32, i32, i32) {
    %c0_i32 = arith.constant 0 : i32
    %c0_i32_0 = arith.constant 0 : i32
    %c0_i32_1 = arith.constant 0 : i32
    return %arg0, %c0_i32, %c0_i32_0 : i32, i32, i32
  }
}

</mosaic_0001>

<llo_original>
// kernel: tpu_custom_call.1
$region0: #{tpu_custom_call.1}
  #allocation0 [shape = 'u32[]', space=smem, size = 0x4, offset = 0x4, fixed_abs, tag = 'smem constant byte address 0x4 - core index']
  #allocation1 [shape = 'u32[72,128]{1,0:T(1,128)}', space=vmem, size = 0x9000, scoped, tag = 'internal scratch']
  %s0 = inlined_call_operand.hbm [shape: f32[2,8,32], index: 0, kind: input, shape index: {}]
  %s1 = inlined_call_operand.hbm [shape: f32[2,8,32], index: 1, kind: input, shape index: {}]
  %s2 = inlined_call_operand.hbm [shape: f32[2,8,32], index: 2, kind: input, shape index: {}]
  %s3 = inlined_call_operand.hbm [shape: s32[1,8,8], index: 3, kind: input, shape index: {}]
  %s4 = inlined_call_operand.hbm [shape: f32[32,32], index: 4, kind: input, shape index: {}]
  %s5 = inlined_call_operand.vmem [shape: f32[1,32], index: 5, kind: input, shape index: {}]
  %s6 = inlined_call_operand.hbm [shape: f32[32,32], index: 6, kind: input, shape index: {}]
  %s7 = inlined_call_operand.vmem [shape: f32[1,32], index: 7, kind: input, shape index: {}]
  %s8 = inlined_call_operand.hbm [shape: f32[32,32], index: 8, kind: input, shape index: {}]
  %s9 = inlined_call_operand.vmem [shape: f32[1,32], index: 9, kind: input, shape index: {}]
  %s10 = inlined_call_operand.hbm [shape: f32[32,32], index: 10, kind: input, shape index: {}]
  %s11 = inlined_call_operand.vmem [shape: f32[1,32], index: 11, kind: input, shape index: {}]
  %s12 = inlined_call_operand.hbm [shape: f32[2,8,32], index: 12, kind: output, shape index: {}]
  %s13 = sld [smem:[#allocation0]]
  $region113: #{tpu_custom_call.1} parent=0
    _
  %s15 = ssub.s32 1, %s13
  %s16 = scalar_select 0, %s15, %s13
  $region1: #{tpu_custom_call.1} parent=0
    #allocation2 [shape = 'u8[8192]{0}', space=vmem, size = 0x2000, scoped, tag = 'input window, operand 0']
    #allocation3 [shape = 's32[2]{0}', space=sflag, size = 0x8, scoped, tag = 'scoped memory for tpu_custom_call.1']
    #allocation4 [shape = 's32[2]{0}', space=sflag, size = 0x8, scoped, tag = 'scoped memory for tpu_custom_call.1']
    #allocation5 [shape = 'u8[8192]{0}', space=vmem, size = 0x2000, scoped, tag = 'input window, operand 1']
    #allocation6 [shape = 's32[2]{0}', space=sflag, size = 0x8, scoped, tag = 'scoped memory for tpu_custom_call.1']
    #allocation7 [shape = 'u8[8192]{0}', space=vmem, size = 0x2000, scoped, tag = 'input window, operand 2']
    #allocation8 [shape = 'u8[4096]{0}', space=vmem, size = 0x1000, scoped, tag = 'input window, operand 3, single buffered']
    #allocation9 [shape = 's32[1]{0}', space=sflag, size = 0x4, scoped, tag = 'scoped memory for tpu_custom_call.1']
    #allocation10 [shape = 'u8[16384]{0}', space=vmem, size = 0x4000, scoped, tag = 'input window, operand 4, single buffered']
    #allocation11 [shape = 'u8[16384]{0}', space=vmem, size = 0x4000, scoped, tag = 'input window, operand 6, single buffered']
    #allocation12 [shape = 's32[1]{0}', space=sflag, size = 0x4, scoped, tag = 'scoped memory for tpu_custom_call.1']
    #allocation13 [shape = 'u8[16384]{0}', space=vmem, size = 0x4000, scoped, tag = 'input window, operand 8, single buffered']
    #allocation14 [shape = 'u8[16384]{0}', space=vmem, size = 0x4000, scoped, tag = 'input window, operand 10, single buffered']
    #allocation15 [shape = 's32[1]{0}', space=sflag, size = 0x4, scoped, tag = 'scoped memory for tpu_custom_call.1']
    #allocation16 [shape = 'u8[8192]{0}', space=vmem, size = 0x2000, scoped, tag = 'output window, operand 0']
    %17 = vsyncpa [#allocation3], 0
    %s18 = scalar_lea.sflag [#allocation3], 1
    %19 = vsyncpa %s18, 0
    %20 = vsyncpa [#allocation6], 0
    %s21 = scalar_lea.sflag [#allocation6], 1
    %22 = vsyncpa %s21, 0
    %23 = vsyncpa [#allocation9], 0
    %24 = vsyncpa [#allocation12], 0
    %25 = vsyncpa [#allocation15], 0
    %26 = vsyncpa [#allocation4], 0
    %s27 = scalar_lea.sflag [#allocation4], 1
    %28 = vsyncpa %s27, 0
    loop: start=0, step=1, limit=4
    $region2: #{tpu_custom_call.1} parent=1 // loop_pre_header
      _
    $region3: #{tpu_custom_call.1} parent=1 // loop_header
      %s30 = sphi 0, %s34
      %p31 = scmp.ge.s32.totalorder %s30, 4
      %s40 = sphi 0, %s42
      %s43 = sphi 0, %s40
      %s44 = sphi 0, %s43
      %s60 = sphi 0, %s44
      %s66 = sphi 0, %s68
      %s69 = sphi 0, %s66
      %s70 = sphi 0, %s69
      %s86 = sphi 0, %s70
      %s92 = sphi 0, %s94
      %s95 = sphi 0, %s92
      %s96 = sphi 0, %s95
      %s112 = sphi 0, %s96
      %s116 = sphi 0, %s116
      %s118 = sphi 0, %s116
      %s119 = sphi 0, %s118
      %s133 = sphi 0, %s119
      %s137 = sphi 0, %s137
      %s139 = sphi 0, %s137
      %s140 = sphi 0, %s139
      %s154 = sphi 0, %s140
      %s158 = sphi 0, %s158
      %s160 = sphi 0, %s158
      %s161 = sphi 0, %s160
      %s175 = sphi 0, %s161
      %s179 = sphi 0, %s179
      %s181 = sphi 0, %s179
      %s182 = sphi 0, %s181
      %s196 = sphi 0, %s182
      %s200 = sphi 0, %s200
      %s202 = sphi 0, %s200
      %s203 = sphi 0, %s202
      %s217 = sphi 0, %s203
      %s221 = sphi 0, %s221
      %s223 = sphi 0, %s221
      %s224 = sphi 0, %s223
      %s238 = sphi 0, %s224
      %s242 = sphi 0, %s242
      %s244 = sphi 0, %s242
      %s245 = sphi 0, %s244
      %s259 = sphi 0, %s245
      %s263 = sphi 0, %s263
      %s265 = sphi 0, %s263
      %s266 = sphi 0, %s265
      %s280 = sphi 0, %s266
      %s284 = sphi 0, %s284
      %s286 = sphi 0, %s284
      %s287 = sphi 0, %s286
      %s301 = sphi 0, %s287
      %s307 = sphi 0, %s309
      %s310 = sphi 0, %s307
      %s311 = sphi 0, %s310
      %s327 = sphi 0, %s311
    $region4: #{tpu_custom_call.1} parent=1 // loop_header_branch
      %33 = sbr.rel (%p31) target = $region8
    $region5: #{tpu_custom_call.1} parent=1 // loop_body
      %s35 = ssub.s32 %s30, 1
      %s36 = ssub.s32 %s30, 2
      %s37 = sadd.s32 %s30, 1
      %s38 = ssub.s32 %s30, %s37
      %p39 = scmp.eq.s32.totalorder %s38, 0
      %s41 = sadd.s32 %s40, 1
      %s42 = scalar_select %p39, %s40, %s41
      %p45 = pneg %p39
      %p46 = scmp.eq.s32.totalorder %s30, 1
      %p47 = por %p45, %p46
      %p48 = scmp.ne.s32.totalorder %s40, %s43
      %p49 = scmp.eq.s32.totalorder %s30, 0
      %p50 = por %p48, %p49
      %p51 = scmp.ne.s32.totalorder %s40, %s43
      %p52 = scmp.eq.s32.totalorder %s35, 1
      %p53 = por %p51, %p52
      %p54 = scmp.ne.s32.totalorder %s43, %s44
      %p55 = scmp.eq.s32.totalorder %s35, 0
      %p56 = por %p54, %p55
      %p57 = scmp.ne.s32.totalorder %s43, %s44
      %p58 = scmp.eq.s32.totalorder %s36, 1
      %p59 = por %p57, %p58
      %p61 = scmp.ne.s32.totalorder %s44, %s60
      %p62 = scmp.eq.s32.totalorder %s36, 0
      %p63 = por %p61, %p62
      %s64 = ssub.s32 %s30, %s37
      %p65 = scmp.eq.s32.totalorder %s64, 0
      %s67 = sadd.s32 %s66, 1
      %s68 = scalar_select %p65, %s66, %s67
      %p71 = pneg %p65
      %p72 = scmp.eq.s32.totalorder %s30, 1
      %p73 = por %p71, %p72
      %p74 = scmp.ne.s32.totalorder %s66, %s69
      %p75 = scmp.eq.s32.totalorder %s30, 0
      %p76 = por %p74, %p75
      %p77 = scmp.ne.s32.totalorder %s66, %s69
      %p78 = scmp.eq.s32.totalorder %s35, 1
      %p79 = por %p77, %p78
      %p80 = scmp.ne.s32.totalorder %s69, %s70
      %p81 = scmp.eq.s32.totalorder %s35, 0
      %p82 = por %p80, %p81
      %p83 = scmp.ne.s32.totalorder %s69, %s70
      %p84 = scmp.eq.s32.totalorder %s36, 1
      %p85 = por %p83, %p84
      %p87 = scmp.ne.s32.totalorder %s70, %s86
      %p88 = scmp.eq.s32.totalorder %s36, 0
      %p89 = por %p87, %p88
      %s90 = ssub.s32 %s30, %s37
      %p91 = scmp.eq.s32.totalorder %s90, 0
      %s93 = sadd.s32 %s92, 1
      %s94 = scalar_select %p91, %s92, %s93
      %p97 = pneg %p91
      %p98 = scmp.eq.s32.totalorder %s30, 1
      %p99 = por %p97, %p98
      %p100 = scmp.ne.s32.totalorder %s92, %s95
      %p101 = scmp.eq.s32.totalorder %s30, 0
      %p102 = por %p100, %p101
      %p103 = scmp.ne.s32.totalorder %s92, %s95
      %p104 = scmp.eq.s32.totalorder %s35, 1
      %p105 = por %p103, %p104
      %p106 = scmp.ne.s32.totalorder %s95, %s96
      %p107 = scmp.eq.s32.totalorder %s35, 0
      %p108 = por %p106, %p107
      %p109 = scmp.ne.s32.totalorder %s95, %s96
      %p110 = scmp.eq.s32.totalorder %s36, 1
      %p111 = por %p109, %p110
      %p113 = scmp.ne.s32.totalorder %s96, %s112
      %p114 = scmp.eq.s32.totalorder %s36, 0
      %p115 = por %p113, %p114
      %s117 = sadd.s32 %s116, 1
      %p120 = scmp.eq.s32.totalorder %s30, 1
      %p121 = scmp.ne.s32.totalorder %s116, %s118
      %p122 = scmp.eq.s32.totalorder %s30, 0
      %p123 = por %p121, %p122
      %p124 = scmp.ne.s32.totalorder %s116, %s118
      %p125 = scmp.eq.s32.totalorder %s35, 1
      %p126 = por %p124, %p125
      %p127 = scmp.ne.s32.totalorder %s118, %s119
      %p128 = scmp.eq.s32.totalorder %s35, 0
      %p129 = por %p127, %p128
      %p130 = scmp.ne.s32.totalorder %s118, %s119
      %p131 = scmp.eq.s32.totalorder %s36, 1
      %p132 = por %p130, %p131
      %p134 = scmp.ne.s32.totalorder %s119, %s133
      %p135 = scmp.eq.s32.totalorder %s36, 0
      %p136 = por %p134, %p135
      %s138 = sadd.s32 %s137, 1
      %p141 = scmp.eq.s32.totalorder %s30, 1
      %p142 = scmp.ne.s32.totalorder %s137, %s139
      %p143 = scmp.eq.s32.totalorder %s30, 0
      %p144 = por %p142, %p143
      %p145 = scmp.ne.s32.totalorder %s137, %s139
      %p146 = scmp.eq.s32.totalorder %s35, 1
      %p147 = por %p145, %p146
      %p148 = scmp.ne.s32.totalorder %s139, %s140
      %p149 = scmp.eq.s32.totalorder %s35, 0
      %p150 = por %p148, %p149
      %p151 = scmp.ne.s32.totalorder %s139, %s140
      %p152 = scmp.eq.s32.totalorder %s36, 1
      %p153 = por %p151, %p152
      %p155 = scmp.ne.s32.totalorder %s140, %s154
      %p156 = scmp.eq.s32.totalorder %s36, 0
      %p157 = por %p155, %p156
      %s159 = sadd.s32 %s158, 1
      %p162 = scmp.eq.s32.totalorder %s30, 1
      %p163 = scmp.ne.s32.totalorder %s158, %s160
      %p164 = scmp.eq.s32.totalorder %s30, 0
      %p165 = por %p163, %p164
      %p166 = scmp.ne.s32.totalorder %s158, %s160
      %p167 = scmp.eq.s32.totalorder %s35, 1
      %p168 = por %p166, %p167
      %p169 = scmp.ne.s32.totalorder %s160, %s161
      %p170 = scmp.eq.s32.totalorder %s35, 0
      %p171 = por %p169, %p170
      %p172 = scmp.ne.s32.totalorder %s160, %s161
      %p173 = scmp.eq.s32.totalorder %s36, 1
      %p174 = por %p172, %p173
      %p176 = scmp.ne.s32.totalorder %s161, %s175
      %p177 = scmp.eq.s32.totalorder %s36, 0
      %p178 = por %p176, %p177
      %s180 = sadd.s32 %s179, 1
      %p183 = scmp.eq.s32.totalorder %s30, 1
      %p184 = scmp.ne.s32.totalorder %s179, %s181
      %p185 = scmp.eq.s32.totalorder %s30, 0
      %p186 = por %p184, %p185
      %p187 = scmp.ne.s32.totalorder %s179, %s181
      %p188 = scmp.eq.s32.totalorder %s35, 1
      %p189 = por %p187, %p188
      %p190 = scmp.ne.s32.totalorder %s181, %s182
      %p191 = scmp.eq.s32.totalorder %s35, 0
      %p192 = por %p190, %p191
      %p193 = scmp.ne.s32.totalorder %s181, %s182
      %p194 = scmp.eq.s32.totalorder %s36, 1
      %p195 = por %p193, %p194
      %p197 = scmp.ne.s32.totalorder %s182, %s196
      %p198 = scmp.eq.s32.totalorder %s36, 0
      %p199 = por %p197, %p198
      %s201 = sadd.s32 %s200, 1
      %p204 = scmp.eq.s32.totalorder %s30, 1
      %p205 = scmp.ne.s32.totalorder %s200, %s202
      %p206 = scmp.eq.s32.totalorder %s30, 0
      %p207 = por %p205, %p206
      %p208 = scmp.ne.s32.totalorder %s200, %s202
      %p209 = scmp.eq.s32.totalorder %s35, 1
      %p210 = por %p208, %p209
      %p211 = scmp.ne.s32.totalorder %s202, %s203
      %p212 = scmp.eq.s32.totalorder %s35, 0
      %p213 = por %p211, %p212
      %p214 = scmp.ne.s32.totalorder %s202, %s203
      %p215 = scmp.eq.s32.totalorder %s36, 1
      %p216 = por %p214, %p215
      %p218 = scmp.ne.s32.totalorder %s203, %s217
      %p219 = scmp.eq.s32.totalorder %s36, 0
      %p220 = por %p218, %p219
      %s222 = sadd.s32 %s221, 1
      %p225 = scmp.eq.s32.totalorder %s30, 1
      %p226 = scmp.ne.s32.totalorder %s221, %s223
      %p227 = scmp.eq.s32.totalorder %s30, 0
      %p228 = por %p226, %p227
      %p229 = scmp.ne.s32.totalorder %s221, %s223
      %p230 = scmp.eq.s32.totalorder %s35, 1
      %p231 = por %p229, %p230
      %p232 = scmp.ne.s32.totalorder %s223, %s224
      %p233 = scmp.eq.s32.totalorder %s35, 0
      %p234 = por %p232, %p233
      %p235 = scmp.ne.s32.totalorder %s223, %s224
      %p236 = scmp.eq.s32.totalorder %s36, 1
      %p237 = por %p235, %p236
      %p239 = scmp.ne.s32.totalorder %s224, %s238
      %p240 = scmp.eq.s32.totalorder %s36, 0
      %p241 = por %p239, %p240
      %s243 = sadd.s32 %s242, 1
      %p246 = scmp.eq.s32.totalorder %s30, 1
      %p247 = scmp.ne.s32.totalorder %s242, %s244
      %p248 = scmp.eq.s32.totalorder %s30, 0
      %p249 = por %p247, %p248
      %p250 = scmp.ne.s32.totalorder %s242, %s244
      %p251 = scmp.eq.s32.totalorder %s35, 1
      %p252 = por %p250, %p251
      %p253 = scmp.ne.s32.totalorder %s244, %s245
      %p254 = scmp.eq.s32.totalorder %s35, 0
      %p255 = por %p253, %p254
      %p256 = scmp.ne.s32.totalorder %s244, %s245
      %p257 = scmp.eq.s32.totalorder %s36, 1
      %p258 = por %p256, %p257
      %p260 = scmp.ne.s32.totalorder %s245, %s259
      %p261 = scmp.eq.s32.totalorder %s36, 0
      %p262 = por %p260, %p261
      %s264 = sadd.s32 %s263, 1
      %p267 = scmp.eq.s32.totalorder %s30, 1
      %p268 = scmp.ne.s32.totalorder %s263, %s265
      %p269 = scmp.eq.s32.totalorder %s30, 0
      %p270 = por %p268, %p269
      %p271 = scmp.ne.s32.totalorder %s263, %s265
      %p272 = scmp.eq.s32.totalorder %s35, 1
      %p273 = por %p271, %p272
      %p274 = scmp.ne.s32.totalorder %s265, %s266
      %p275 = scmp.eq.s32.totalorder %s35, 0
      %p276 = por %p274, %p275
      %p277 = scmp.ne.s32.totalorder %s265, %s266
      %p278 = scmp.eq.s32.totalorder %s36, 1
      %p279 = por %p277, %p278
      %p281 = scmp.ne.s32.totalorder %s266, %s280
      %p282 = scmp.eq.s32.totalorder %s36, 0
      %p283 = por %p281, %p282
      %s285 = sadd.s32 %s284, 1
      %p288 = scmp.eq.s32.totalorder %s30, 1
      %p289 = scmp.ne.s32.totalorder %s284, %s286
      %p290 = scmp.eq.s32.totalorder %s30, 0
      %p291 = por %p289, %p290
      %p292 = scmp.ne.s32.totalorder %s284, %s286
      %p293 = scmp.eq.s32.totalorder %s35, 1
      %p294 = por %p292, %p293
      %p295 = scmp.ne.s32.totalorder %s286, %s287
      %p296 = scmp.eq.s32.totalorder %s35, 0
      %p297 = por %p295, %p296
      %p298 = scmp.ne.s32.totalorder %s286, %s287
      %p299 = scmp.eq.s32.totalorder %s36, 1
      %p300 = por %p298, %p299
      %p302 = scmp.ne.s32.totalorder %s287, %s301
      %p303 = scmp.eq.s32.totalorder %s36, 0
      %p304 = por %p302, %p303
      %s305 = ssub.s32 %s30, %s37
      %p306 = scmp.eq.s32.totalorder %s305, 0
      %s308 = sadd.s32 %s307, 1
      %s309 = scalar_select %p306, %s307, %s308
      %p312 = pneg %p306
      %p313 = scmp.eq.s32.totalorder %s30, 1
      %p314 = por %p312, %p313
      %p315 = scmp.ne.s32.totalorder %s307, %s310
      %p316 = scmp.eq.s32.totalorder %s30, 0
      %p317 = por %p315, %p316
      %p318 = scmp.ne.s32.totalorder %s307, %s310
      %p319 = scmp.eq.s32.totalorder %s35, 1
      %p320 = por %p318, %p319
      %p321 = scmp.ne.s32.totalorder %s310, %s311
      %p322 = scmp.eq.s32.totalorder %s35, 0
      %p323 = por %p321, %p322
      %p324 = scmp.ne.s32.totalorder %s310, %s311
      %p325 = scmp.eq.s32.totalorder %s36, 1
      %p326 = por %p324, %p325
      %p328 = scmp.ne.s32.totalorder %s311, %s327
      %p329 = scmp.eq.s32.totalorder %s36, 0
      %p330 = por %p328, %p329
      %p331 = scmp.le.s32.totalorder 1, %s30
      %p332 = scmp.lt.s32.totalorder %s30, 3
      %p333 = pnand %p331, %p332
      %p334 = pneg %p333
      // Predicated region
      $region9: #{tpu_custom_call.1} parent=5 // pred_check
        _
      $region10: #{tpu_custom_call.1} parent=5 // pred_check_branch
        %336 = sbr.rel (%p333) target = $region12
      $region11: #{tpu_custom_call.1} parent=5 // pred_region
        %s337 = ssub.s32 %s30, 1
        // Predicated region
        $region13: #{tpu_custom_call.1} parent=11 // pred_check
          %p338 = pneg %p129
        $region14: #{tpu_custom_call.1} parent=11 // pred_check_branch
          %340 = sbr.rel (%p338) target = $region16
        $region15: #{tpu_custom_call.1} parent=11 // pred_region
          %342 = vsyncadd [#allocation9], 0
          %s344 = sshll.u32 %s3, 4
          %s345 = int_to_ptr.hbm [resolvable:$true] %s344
          %s346 = sshll.u32 [#allocation8], 4
          %s347 = int_to_ptr.vmem [resolvable:$true] %s346
          %349 = dma.hbm_to_vmem [thread:$0]  %s345, 128, %s347, [#allocation9]
        $region16: #{tpu_custom_call.1} parent=11 // pred_fallthru
          _
        // Predicated region
        $region17: #{tpu_custom_call.1} parent=11 // pred_check
          %p350 = pneg %p150
        $region18: #{tpu_custom_call.1} parent=11 // pred_check_branch
          %352 = sbr.rel (%p350) target = $region20
        $region19: #{tpu_custom_call.1} parent=11 // pred_region
          %354 = vsyncadd [#allocation9], 0
          %s355 = sshll.u32 %s4, 4
          %s356 = int_to_ptr.hbm [resolvable:$true] %s355
          %s357 = sshll.u32 [#allocation10], 4
          %s358 = int_to_ptr.vmem [resolvable:$true] %s357
          %363 = dma.hbm_to_vmem [thread:$0]  %s356, 512, %s358, [#allocation9], 128, 128, 8
        $region20: #{tpu_custom_call.1} parent=11 // pred_fallthru
          _
        // Predicated region
        $region21: #{tpu_custom_call.1} parent=11 // pred_check
          %p364 = pneg %p171
        $region22: #{tpu_custom_call.1} parent=11 // pred_check_branch
          %366 = sbr.rel (%p364) target = $region24
        $region23: #{tpu_custom_call.1} parent=11 // pred_region
          _
        $region24: #{tpu_custom_call.1} parent=11 // pred_fallthru
          _
        // Predicated region
        $region25: #{tpu_custom_call.1} parent=11 // pred_check
          %p367 = pneg %p192
        $region26: #{tpu_custom_call.1} parent=11 // pred_check_branch
          %369 = sbr.rel (%p367) target = $region28
        $region27: #{tpu_custom_call.1} parent=11 // pred_region
          %371 = vsyncadd [#allocation12], 0
          %s372 = sshll.u32 %s6, 4
          %s373 = int_to_ptr.hbm [resolvable:$true] %s372
          %s374 = sshll.u32 [#allocation11], 4
          %s375 = int_to_ptr.vmem [resolvable:$true] %s374
          %380 = dma.hbm_to_vmem [thread:$0]  %s373, 512, %s375, [#allocation12], 128, 128, 8
        $region28: #{tpu_custom_call.1} parent=11 // pred_fallthru
          _
        // Predicated region
        $region29: #{tpu_custom_call.1} parent=11 // pred_check
          %p381 = pneg %p213
        $region30: #{tpu_custom_call.1} parent=11 // pred_check_branch
          %383 = sbr.rel (%p381) target = $region32
        $region31: #{tpu_custom_call.1} parent=11 // pred_region
          _
        $region32: #{tpu_custom_call.1} parent=11 // pred_fallthru
          _
        // Predicated region
        $region33: #{tpu_custom_call.1} parent=11 // pred_check
          %p384 = pneg %p234
        $region34: #{tpu_custom_call.1} parent=11 // pred_check_branch
          %386 = sbr.rel (%p384) target = $region36
        $region35: #{tpu_custom_call.1} parent=11 // pred_region
          %388 = vsyncadd [#allocation12], 0
          %s389 = sshll.u32 %s8, 4
          %s390 = int_to_ptr.hbm [resolvable:$true] %s389
          %s391 = sshll.u32 [#allocation13], 4
          %s392 = int_to_ptr.vmem [resolvable:$true] %s391
          %397 = dma.hbm_to_vmem [thread:$0]  %s390, 512, %s392, [#allocation12], 128, 128, 8
        $region36: #{tpu_custom_call.1} parent=11 // pred_fallthru
          _
        // Predicated region
        $region37: #{tpu_custom_call.1} parent=11 // pred_check
          %p398 = pneg %p255
        $region38: #{tpu_custom_call.1} parent=11 // pred_check_branch
          %400 = sbr.rel (%p398) target = $region40
        $region39: #{tpu_custom_call.1} parent=11 // pred_region
          _
        $region40: #{tpu_custom_call.1} parent=11 // pred_fallthru
          _
        // Predicated region
        $region41: #{tpu_custom_call.1} parent=11 // pred_check
          %p401 = pneg %p276
        $region42: #{tpu_custom_call.1} parent=11 // pred_check_branch
          %403 = sbr.rel (%p401) target = $region44
        $region43: #{tpu_custom_call.1} parent=11 // pred_region
          %405 = vsyncadd [#allocation15], 0
          %s406 = sshll.u32 %s10, 4
          %s407 = int_to_ptr.hbm [resolvable:$true] %s406
          %s408 = sshll.u32 [#allocation14], 4
          %s409 = int_to_ptr.vmem [resolvable:$true] %s408
          %414 = dma.hbm_to_vmem [thread:$0]  %s407, 512, %s409, [#allocation15], 128, 128, 8
        $region44: #{tpu_custom_call.1} parent=11 // pred_fallthru
          _
        // Predicated region
        $region45: #{tpu_custom_call.1} parent=11 // pred_check
          %p415 = pneg %p297
        $region46: #{tpu_custom_call.1} parent=11 // pred_check_branch
          %417 = sbr.rel (%p415) target = $region48
        $region47: #{tpu_custom_call.1} parent=11 // pred_region
          _
        $region48: #{tpu_custom_call.1} parent=11 // pred_fallthru
          _
      $region12: #{tpu_custom_call.1} parent=5 // pred_fallthru
        _
      %p418 = scmp.lt.s32.totalorder %s30, 2
      // Predicated region
      $region49: #{tpu_custom_call.1} parent=5 // pred_check
        %p419 = pneg %p418
      $region50: #{tpu_custom_call.1} parent=5 // pred_check_branch
        %421 = sbr.rel (%p419) target = $region52
      $region51: #{tpu_custom_call.1} parent=5 // pred_region
        // Predicated region
        $region53: #{tpu_custom_call.1} parent=51 // pred_check
          %p422 = pneg %p50
        $region54: #{tpu_custom_call.1} parent=51 // pred_check_branch
          %424 = sbr.rel (%p422) target = $region56
        $region55: #{tpu_custom_call.1} parent=51 // pred_region
          %s425 = sand.u32 %s40, 1
          %s426 = scalar_lea.sflag [#allocation3], %s425
          %s427 = sand.u32 %s40, 1
          %s428 = smul.addr %s427, 8
          %s429 = scalar_lea.vmem [#allocation2], %s428
          %431 = vsyncadd %s426, 0
          %s432 = smul.addr %s30, 8
          %s433 = scalar_lea.hbm %s0, %s432
          %s435 = sshll.u32 %s433, 4
          %s436 = int_to_ptr.hbm [resolvable:$true] %s435
          %s437 = sshll.u32 %s429, 4
          %s438 = int_to_ptr.vmem [resolvable:$true] %s437
          %440 = dma.hbm_to_vmem [thread:$0]  %s436, 128, %s438, %s426
        $region56: #{tpu_custom_call.1} parent=51 // pred_fallthru
          _
        // Predicated region
        $region57: #{tpu_custom_call.1} parent=51 // pred_check
          %p441 = pneg %p76
        $region58: #{tpu_custom_call.1} parent=51 // pred_check_branch
          %443 = sbr.rel (%p441) target = $region60
        $region59: #{tpu_custom_call.1} parent=51 // pred_region
          %s444 = sand.u32 %s30, 1
          %s445 = scalar_lea.sflag [#allocation6], %s444
          %s446 = sand.u32 %s66, 1
          %s447 = smul.addr %s446, 8
          %s448 = scalar_lea.vmem [#allocation5], %s447
          %450 = vsyncadd %s445, 0
          %s451 = smul.addr %s30, 8
          %s452 = scalar_lea.hbm %s1, %s451
          %s454 = sshll.u32 %s452, 4
          %s455 = int_to_ptr.hbm [resolvable:$true] %s454
          %s456 = sshll.u32 %s448, 4
          %s457 = int_to_ptr.vmem [resolvable:$true] %s456
          %459 = dma.hbm_to_vmem [thread:$0]  %s455, 128, %s457, %s445
        $region60: #{tpu_custom_call.1} parent=51 // pred_fallthru
          _
        // Predicated region
        $region61: #{tpu_custom_call.1} parent=51 // pred_check
          %p460 = pneg %p102
        $region62: #{tpu_custom_call.1} parent=51 // pred_check_branch
          %462 = sbr.rel (%p460) target = $region64
        $region63: #{tpu_custom_call.1} parent=51 // pred_region
          %s463 = sand.u32 %s30, 1
          %s464 = scalar_lea.sflag [#allocation6], %s463
          %s465 = sand.u32 %s92, 1
          %s466 = smul.addr %s465, 8
          %s467 = scalar_lea.vmem [#allocation7], %s466
          %469 = vsyncadd %s464, 0
          %s470 = smul.addr %s30, 8
          %s471 = scalar_lea.hbm %s2, %s470
          %s473 = sshll.u32 %s471, 4
          %s474 = int_to_ptr.hbm [resolvable:$true] %s473
          %s475 = sshll.u32 %s467, 4
          %s476 = int_to_ptr.vmem [resolvable:$true] %s475
          %478 = dma.hbm_to_vmem [thread:$0]  %s474, 128, %s476, %s464
        $region64: #{tpu_custom_call.1} parent=51 // pred_fallthru
          _
      $region52: #{tpu_custom_call.1} parent=5 // pred_fallthru
        _
      %p479 = scmp.le.s32.totalorder 1, %s30
      %p480 = scmp.lt.s32.totalorder %s30, 3
      %p481 = pnand %p479, %p480
      %p482 = pneg %p481
      // Predicated region
      $region65: #{tpu_custom_call.1} parent=5 // pred_check
        _
      $region66: #{tpu_custom_call.1} parent=5 // pred_check_branch
        %484 = sbr.rel (%p481) target = $region68
      $region67: #{tpu_custom_call.1} parent=5 // pred_region
        %s485 = ssub.s32 %s30, 1
        %s486 = sand.u32 %s43, 1
        %s487 = scalar_lea.sflag [#allocation3], %s486
        %s488 = sand.u32 %s43, 1
        %s489 = smul.addr %s488, 8
        %s490 = scalar_lea.vmem [#allocation2], %s489
        // Predicated region
        $region69: #{tpu_custom_call.1} parent=67 // pred_check
          %p491 = pneg %p56
        $region70: #{tpu_custom_call.1} parent=67 // pred_check_branch
          %493 = sbr.rel (%p491) target = $region72
        $region71: #{tpu_custom_call.1} parent=67 // pred_region
          %495 = dma.done %s487, 128
        $region72: #{tpu_custom_call.1} parent=67 // pred_fallthru
          _
        %s496 = sand.u32 %s35, 1
        %s497 = scalar_lea.sflag [#allocation6], %s496
        %s498 = sand.u32 %s69, 1
        %s499 = smul.addr %s498, 8
        %s500 = scalar_lea.vmem [#allocation5], %s499
        // Predicated region
        $region73: #{tpu_custom_call.1} parent=67 // pred_check
          %p501 = pneg %p82
        $region74: #{tpu_custom_call.1} parent=67 // pred_check_branch
          %503 = sbr.rel (%p501) target = $region76
        $region75: #{tpu_custom_call.1} parent=67 // pred_region
          %505 = dma.done %s497, 128
        $region76: #{tpu_custom_call.1} parent=67 // pred_fallthru
          _
        %s506 = sand.u32 %s35, 1
        %s507 = scalar_lea.sflag [#allocation6], %s506
        %s508 = sand.u32 %s95, 1
        %s509 = smul.addr %s508, 8
        %s510 = scalar_lea.vmem [#allocation7], %s509
        // Predicated region
        $region77: #{tpu_custom_call.1} parent=67 // pred_check
          %p511 = pneg %p108
        $region78: #{tpu_custom_call.1} parent=67 // pred_check_branch
          %513 = sbr.rel (%p511) target = $region80
        $region79: #{tpu_custom_call.1} parent=67 // pred_region
          %515 = dma.done %s507, 128
        $region80: #{tpu_custom_call.1} parent=67 // pred_fallthru
          _
        // Predicated region
        $region81: #{tpu_custom_call.1} parent=67 // pred_check
          %p516 = pneg %p129
        $region82: #{tpu_custom_call.1} parent=67 // pred_check_branch
          %518 = sbr.rel (%p516) target = $region84
        $region83: #{tpu_custom_call.1} parent=67 // pred_region
          %520 = dma.done [#allocation9], 128
        $region84: #{tpu_custom_call.1} parent=67 // pred_fallthru
          _
        // Predicated region
        $region85: #{tpu_custom_call.1} parent=67 // pred_check
          %p521 = pneg %p150
        $region86: #{tpu_custom_call.1} parent=67 // pred_check_branch
          %523 = sbr.rel (%p521) target = $region88
        $region87: #{tpu_custom_call.1} parent=67 // pred_region
          %525 = dma.done [#allocation9], 512
        $region88: #{tpu_custom_call.1} parent=67 // pred_fallthru
          _
        // Predicated region
        $region89: #{tpu_custom_call.1} parent=67 // pred_check
          %p526 = pneg %p192
        $region90: #{tpu_custom_call.1} parent=67 // pred_check_branch
          %528 = sbr.rel (%p526) target = $region92
        $region91: #{tpu_custom_call.1} parent=67 // pred_region
          %530 = dma.done [#allocation12], 512
        $region92: #{tpu_custom_call.1} parent=67 // pred_fallthru
          _
        // Predicated region
        $region93: #{tpu_custom_call.1} parent=67 // pred_check
          %p531 = pneg %p234
        $region94: #{tpu_custom_call.1} parent=67 // pred_check_branch
          %533 = sbr.rel (%p531) target = $region96
        $region95: #{tpu_custom_call.1} parent=67 // pred_region
          %535 = dma.done [#allocation12], 512
        $region96: #{tpu_custom_call.1} parent=67 // pred_fallthru
          _
        // Predicated region
        $region97: #{tpu_custom_call.1} parent=67 // pred_check
          %p536 = pneg %p276
        $region98: #{tpu_custom_call.1} parent=67 // pred_check_branch
          %538 = sbr.rel (%p536) target = $region100
        $region99: #{tpu_custom_call.1} parent=67 // pred_region
          %540 = dma.done [#allocation15], 512
        $region100: #{tpu_custom_call.1} parent=67 // pred_fallthru
          _
        %s541 = sand.u32 %s43, 1
        %s542 = scalar_lea.sflag [#allocation3], %s541
        %s543 = sand.u32 %s43, 1
        %s544 = smul.addr %s543, 8
        %s545 = scalar_lea.vmem [#allocation2], %s544
        %p546 = pneg %p56
        %p547 = pneg %p53
        %s548 = sand.u32 %s35, 1
        %s549 = scalar_lea.sflag [#allocation6], %s548
        %s550 = sand.u32 %s69, 1
        %s551 = smul.addr %s550, 8
        %s552 = scalar_lea.vmem [#allocation5], %s551
        %p553 = pneg %p82
        %p554 = pneg %p79
        %s555 = sand.u32 %s35, 1
        %s556 = scalar_lea.sflag [#allocation6], %s555
        %s557 = sand.u32 %s95, 1
        %s558 = smul.addr %s557, 8
        %s559 = scalar_lea.vmem [#allocation7], %s558
        %p560 = pneg %p108
        %p561 = pneg %p105
        %p562 = pneg %p129
        %p563 = pneg %p126
        %p564 = pneg %p150
        %p565 = pneg %p147
        %p566 = pneg %p171
        %p567 = pneg %p168
        %p568 = pneg %p192
        %p569 = pneg %p189
        %p570 = pneg %p213
        %p571 = pneg %p210
        %p572 = pneg %p234
        %p573 = pneg %p231
        %p574 = pneg %p255
        %p575 = pneg %p252
        %p576 = pneg %p276
        %p577 = pneg %p273
        %p578 = pneg %p297
        %p579 = pneg %p294
        %p580 = pneg %p323
        %p581 = pneg %p320
        %s582 = sand.u32 %s310, 1
        %s583 = scalar_lea.sflag [#allocation4], %s582
        %s584 = sand.u32 %s310, 1
        %s585 = smul.addr %s584, 8
        %s586 = scalar_lea.vmem [#allocation16], %s585
        %v587 = vld [vmem:[%s490] sm:$0xff]
        %v588 = vld [vmem:[%s500] sm:$0xff]
        %v589 = vld [vmem:[%s510] sm:$0xff]
        %v590 = vld [vmem:[#allocation8] sm:$0xff]
        %vm591 = vcmp.eq.s32.totalorder %v590, 0
        %v592 = vld [vmem:[#allocation10] sm:$0xff]
        %v593 = vld [vmem:[#allocation10 + $0x8] sm:$0xff]
        %v594 = vld [vmem:[#allocation10 + $0x10] sm:$0xff]
        %v595 = vld [vmem:[#allocation10 + $0x18] sm:$0xff]
        %v596 = vld [vmem:[#allocation11] sm:$0xff]
        %v597 = vld [vmem:[#allocation11 + $0x8] sm:$0xff]
        %v598 = vld [vmem:[#allocation11 + $0x10] sm:$0xff]
        %v599 = vld [vmem:[#allocation11 + $0x18] sm:$0xff]
        %v600 = vld [vmem:[#allocation13] sm:$0xff]
        %v601 = vld [vmem:[#allocation13 + $0x8] sm:$0xff]
        %v602 = vld [vmem:[#allocation13 + $0x10] sm:$0xff]
        %v603 = vld [vmem:[#allocation13 + $0x18] sm:$0xff]
        %v604 = vld [vmem:[#allocation14] sm:$0xff]
        %v605 = vld [vmem:[#allocation14 + $0x8] sm:$0xff]
        %v606 = vld [vmem:[#allocation14 + $0x10] sm:$0xff]
        %v607 = vld [vmem:[#allocation14 + $0x18] sm:$0xff]
        %v608 = vld [vmem:[%s5] sm:$0x1]
        %v609 = vld [vmem:[%s7] sm:$0x1]
        %v610 = vld [vmem:[%s9] sm:$0x1]
        %v611 = vld [vmem:[%s11] sm:$0x1]
        %v613 = vperm.slane %v608, 0
        %vm615 = vcmask 261120
        %v617 = vsel %vm615, %v587, 0
        %619 = vmatpush.msra.mxu0 0.0
        %620 = vmatpush.msra.mxu0 0.0
        %621 = vmatpush.msra.mxu0 0.0
        %622 = vmatpush.msra.mxu0 0.0
        %623 = vmatpush.msra.mxu0 0.0
        %624 = vmatpush.msra.mxu0 0.0
        %625 = vmatpush.msra.mxu0 0.0
        %626 = vmatpush.msra.mxu0 0.0
        %627 = vmatpush.msra.mxu0 0.0
        %628 = vmatpush.msra.mxu0 0.0
        %629 = vmatpush.msra.mxu0 0.0
        %630 = vmatpush.msra.mxu0 0.0
        %631 = vmatpush.msra.mxu0 %v595
        %632 = vmatpush.msra.mxu0 %v594
        %633 = vmatpush.msra.mxu0 %v593
        %634 = vmatpush.msra.mxu0 %v592
        %635 = vmatmul.f32.gmra.mxu0 %v617
        %v636 = vpop.f32.mrf.mxu0
        %v637 = vadd.f32 %v613, %v636
        %638 = vdwg.mxu0
        %v639 = vmul.f32 %v637, 0.35355338
        %v641 = vperm.slane %v609, 0
        %v644 = vsel %vm615, %v588, 0
        %646 = vmatpush.msra.mxu0 0.0
        %647 = vmatpush.msra.mxu0 0.0
        %648 = vmatpush.msra.mxu0 0.0
        %649 = vmatpush.msra.mxu0 0.0
        %650 = vmatpush.msra.mxu0 0.0
        %651 = vmatpush.msra.mxu0 0.0
        %652 = vmatpush.msra.mxu0 0.0
        %653 = vmatpush.msra.mxu0 0.0
        %654 = vmatpush.msra.mxu0 0.0
        %655 = vmatpush.msra.mxu0 0.0
        %656 = vmatpush.msra.mxu0 0.0
        %657 = vmatpush.msra.mxu0 0.0
        %658 = vmatpush.msra.mxu0 %v599
        %659 = vmatpush.msra.mxu0 %v598
        %660 = vmatpush.msra.mxu0 %v597
        %661 = vmatpush.msra.mxu0 %v596
        %662 = vmatmul.f32.gmra.mxu0 %v644
        %v663 = vpop.f32.mrf.mxu0
        %v664 = vadd.f32 %v641, %v663
        %665 = vdwg.mxu0
        %v667 = vperm.slane %v610, 0
        %v670 = vsel %vm615, %v589, 0
        %672 = vmatpush.msra.mxu0 0.0
        %673 = vmatpush.msra.mxu0 0.0
        %674 = vmatpush.msra.mxu0 0.0
        %675 = vmatpush.msra.mxu0 0.0
        %676 = vmatpush.msra.mxu0 0.0
        %677 = vmatpush.msra.mxu0 0.0
        %678 = vmatpush.msra.mxu0 0.0
        %679 = vmatpush.msra.mxu0 0.0
        %680 = vmatpush.msra.mxu0 0.0
        %681 = vmatpush.msra.mxu0 0.0
        %682 = vmatpush.msra.mxu0 0.0
        %683 = vmatpush.msra.mxu0 0.0
        %684 = vmatpush.msra.mxu0 %v603
        %685 = vmatpush.msra.mxu0 %v602
        %686 = vmatpush.msra.mxu0 %v601
        %687 = vmatpush.msra.mxu0 %v600
        %688 = vmatmul.f32.gmra.mxu0 %v670
        %v689 = vpop.f32.mrf.mxu0
        %v690 = vadd.f32 %v667, %v689
        %691 = vdwg.mxu0
        %vm692 = vcmask 64512
        %v694 = vsel %vm692, %v639, 0
        %v697 = vsel %vm692, %v664, 0
        %699 = vmatpush.xpose.msra.mxu0 0.0
        %700 = vmatpush.xpose.msra.mxu0 0.0
        %701 = vmatpush.xpose.msra.mxu0 0.0
        %702 = vmatpush.xpose.msra.mxu0 0.0
        %703 = vmatpush.xpose.msra.mxu0 0.0
        %704 = vmatpush.xpose.msra.mxu0 0.0
        %705 = vmatpush.xpose.msra.mxu0 0.0
        %706 = vmatpush.xpose.msra.mxu0 0.0
        %707 = vmatpush.xpose.msra.mxu0 0.0
        %708 = vmatpush.xpose.msra.mxu0 0.0
        %709 = vmatpush.xpose.msra.mxu0 0.0
        %710 = vmatpush.xpose.msra.mxu0 0.0
        %711 = vmatpush.xpose.msra.mxu0 0.0
        %712 = vmatpush.xpose.msra.mxu0 0.0
        %713 = vmatpush.xpose.msra.mxu0 0.0
        %714 = vmatpush.xpose.msra.mxu0 %v697
        %715 = vmatmul.f32.gmra.mxu0 %v694
        %v716 = vpop.f32.mrf.mxu0
        %v717 = vadd.f32 0.0, %v716
        %718 = vdwg.mxu0
        %v719 = vsel %vm591, -1e+09, %v717
        %v720 = vsel %vm692, %v719, -inf
        %721 = vmax.xlane.f32.xlu0 %v720
        %v722 = vpop.xlane.xlu0 %721
        %v723 = vsub.f32 %v719, %v722
        %v724 = vmul.f32 %v723, 1.442695
        %v725 = vpow.pop %v724
        %v726 = vsel %vm692, %v725, 0.0
        %727 = vadd.xlane.f32.xlu0 %v726
        %v728 = vpop.xlane.xlu0 %727
        %v729 = vrcp.pop %v728
        %v730 = vmul.f32 %v728, %v729
        %v731 = vsub.f32 1.0, %v730
        %v732 = vmul.f32 %v729, %v731
        %v733 = vadd.f32 %v729, %v732
        %vm734 = vweird.f32 %v728
        %vm735 = vweird.f32 %v729
        %vm736 = vmor %vm734, %vm735
        %v737 = vsel %vm736, %v729, %v733
        %v738 = vand.u32 2147483647, %v728
        %vm739 = vcmp.eq.f32.partialorder %v738, 8.507059e+37
        %v740 = vand.u32 %v728, 2147483648
        %v741 = vor.u32 1.1754944e-38, %v740
        %v742 = vsel %vm739, %v741, %v737
        %v743 = vmul.f32 %v725, %v742
        %v745 = vsel %vm692, %v743, 0
        %747 = vmatpush.msra.mxu0 0.0
        %748 = vmatpush.msra.mxu0 0.0
        %749 = vmatpush.msra.mxu0 0.0
        %750 = vmatpush.msra.mxu0 0.0
        %751 = vmatpush.msra.mxu0 0.0
        %752 = vmatpush.msra.mxu0 0.0
        %753 = vmatpush.msra.mxu0 0.0
        %754 = vmatpush.msra.mxu0 0.0
        %755 = vmatpush.msra.mxu0 0.0
        %756 = vmatpush.msra.mxu0 0.0
        %757 = vmatpush.msra.mxu0 0.0
        %758 = vmatpush.msra.mxu0 0.0
        %759 = vmatpush.msra.mxu0 0.0
        %760 = vmatpush.msra.mxu0 0.0
        %761 = vmatpush.msra.mxu0 0.0
        %762 = vmatpush.msra.mxu0 %v690
        %763 = vmatmul.f32.gmra.mxu0 %v745
        %v764 = vpop.f32.mrf.mxu0
        %v765 = vadd.f32 0.0, %v764
        %766 = vdwg.mxu0
        %767 = vrot.lane.b32.xlu0 %v639, 120
        %v768 = vpop.permute.xlu0 %767
        %769 = vrot.lane.b32.xlu0 %v664, 120
        %v770 = vpop.permute.xlu0 %769
        %v771 = vsel %vm692, %v768, 0
        %v773 = vsel %vm692, %v770, 0
        %775 = vmatpush.xpose.msra.mxu0 0.0
        %776 = vmatpush.xpose.msra.mxu0 0.0
        %777 = vmatpush.xpose.msra.mxu0 0.0
        %778 = vmatpush.xpose.msra.mxu0 0.0
        %779 = vmatpush.xpose.msra.mxu0 0.0
        %780 = vmatpush.xpose.msra.mxu0 0.0
        %781 = vmatpush.xpose.msra.mxu0 0.0
        %782 = vmatpush.xpose.msra.mxu0 0.0
        %783 = vmatpush.xpose.msra.mxu0 0.0
        %784 = vmatpush.xpose.msra.mxu0 0.0
        %785 = vmatpush.xpose.msra.mxu0 0.0
        %786 = vmatpush.xpose.msra.mxu0 0.0
        %787 = vmatpush.xpose.msra.mxu0 0.0
        %788 = vmatpush.xpose.msra.mxu0 0.0
        %789 = vmatpush.xpose.msra.mxu0 0.0
        %790 = vmatpush.xpose.msra.mxu0 %v773
        %791 = vmatmul.f32.gmra.mxu0 %v771
        %v792 = vpop.f32.mrf.mxu0
        %v793 = vadd.f32 0.0, %v792
        %794 = vdwg.mxu0
        %v795 = vsel %vm591, -1e+09, %v793
        %v796 = vsel %vm692, %v795, -inf
        %797 = vmax.xlane.f32.xlu0 %v796
        %v798 = vpop.xlane.xlu0 %797
        %v799 = vsub.f32 %v795, %v798
        %v800 = vmul.f32 %v799, 1.442695
        %v801 = vpow.pop %v800
        %v802 = vsel %vm692, %v801, 0.0
        %803 = vadd.xlane.f32.xlu0 %v802
        %v804 = vpop.xlane.xlu0 %803
        %v805 = vrcp.pop %v804
        %v806 = vmul.f32 %v804, %v805
        %v807 = vsub.f32 1.0, %v806
        %v808 = vmul.f32 %v805, %v807
        %v809 = vadd.f32 %v805, %v808
        %vm810 = vweird.f32 %v804
        %vm811 = vweird.f32 %v805
        %vm812 = vmor %vm810, %vm811
        %v813 = vsel %vm812, %v805, %v809
        %v814 = vand.u32 2147483647, %v804
        %vm815 = vcmp.eq.f32.partialorder %v814, 8.507059e+37
        %v816 = vand.u32 %v804, 2147483648
        %v817 = vor.u32 1.1754944e-38, %v816
        %v818 = vsel %vm815, %v817, %v813
        %v819 = vmul.f32 %v801, %v818
        %821 = vrot.lane.b32.xlu0 %v690, 120
        %v822 = vpop.permute.xlu0 %821
        %v825 = vsel %vm692, %v819, 0
        %827 = vmatpush.msra.mxu0 0.0
        %828 = vmatpush.msra.mxu0 0.0
        %829 = vmatpush.msra.mxu0 0.0
        %830 = vmatpush.msra.mxu0 0.0
        %831 = vmatpush.msra.mxu0 0.0
        %832 = vmatpush.msra.mxu0 0.0
        %833 = vmatpush.msra.mxu0 0.0
        %834 = vmatpush.msra.mxu0 0.0
        %835 = vmatpush.msra.mxu0 0.0
        %836 = vmatpush.msra.mxu0 0.0
        %837 = vmatpush.msra.mxu0 0.0
        %838 = vmatpush.msra.mxu0 0.0
        %839 = vmatpush.msra.mxu0 0.0
        %840 = vmatpush.msra.mxu0 0.0
        %841 = vmatpush.msra.mxu0 0.0
        %842 = vmatpush.msra.mxu0 %v822
        %843 = vmatmul.f32.gmra.mxu0 %v825
        %v844 = vpop.f32.mrf.mxu0
        %v845 = vadd.f32 0.0, %v844
        %846 = vdwg.mxu0
        %847 = vrot.lane.b32.xlu0 %v639, 112
        %v848 = vpop.permute.xlu0 %847
        %849 = vrot.lane.b32.xlu0 %v664, 112
        %v850 = vpop.permute.xlu0 %849
        %v851 = vsel %vm692, %v848, 0
        %v853 = vsel %vm692, %v850, 0
        %855 = vmatpush.xpose.msra.mxu0 0.0
        %856 = vmatpush.xpose.msra.mxu0 0.0
        %857 = vmatpush.xpose.msra.mxu0 0.0
        %858 = vmatpush.xpose.msra.mxu0 0.0
        %859 = vmatpush.xpose.msra.mxu0 0.0
        %860 = vmatpush.xpose.msra.mxu0 0.0
        %861 = vmatpush.xpose.msra.mxu0 0.0
        %862 = vmatpush.xpose.msra.mxu0 0.0
        %863 = vmatpush.xpose.msra.mxu0 0.0
        %864 = vmatpush.xpose.msra.mxu0 0.0
        %865 = vmatpush.xpose.msra.mxu0 0.0
        %866 = vmatpush.xpose.msra.mxu0 0.0
        %867 = vmatpush.xpose.msra.mxu0 0.0
        %868 = vmatpush.xpose.msra.mxu0 0.0
        %869 = vmatpush.xpose.msra.mxu0 0.0
        %870 = vmatpush.xpose.msra.mxu0 %v853
        %871 = vmatmul.f32.gmra.mxu0 %v851
        %v872 = vpop.f32.mrf.mxu0
        %v873 = vadd.f32 0.0, %v872
        %874 = vdwg.mxu0
        %v875 = vsel %vm591, -1e+09, %v873
        %v876 = vsel %vm692, %v875, -inf
        %877 = vmax.xlane.f32.xlu0 %v876
        %v878 = vpop.xlane.xlu0 %877
        %v879 = vsub.f32 %v875, %v878
        %v880 = vmul.f32 %v879, 1.442695
        %v881 = vpow.pop %v880
        %v882 = vsel %vm692, %v881, 0.0
        %883 = vadd.xlane.f32.xlu0 %v882
        %v884 = vpop.xlane.xlu0 %883
        %v885 = vrcp.pop %v884
        %v886 = vmul.f32 %v884, %v885
        %v887 = vsub.f32 1.0, %v886
        %v888 = vmul.f32 %v885, %v887
        %v889 = vadd.f32 %v885, %v888
        %vm890 = vweird.f32 %v884
        %vm891 = vweird.f32 %v885
        %vm892 = vmor %vm890, %vm891
        %v893 = vsel %vm892, %v885, %v889
        %v894 = vand.u32 2147483647, %v884
        %vm895 = vcmp.eq.f32.partialorder %v894, 8.507059e+37
        %v896 = vand.u32 %v884, 2147483648
        %v897 = vor.u32 1.1754944e-38, %v896
        %v898 = vsel %vm895, %v897, %v893
        %v899 = vmul.f32 %v881, %v898
        %900 = vrot.lane.b32.xlu0 %v690, 112
        %v901 = vpop.permute.xlu0 %900
        %v904 = vsel %vm692, %v899, 0
        %906 = vmatpush.msra.mxu0 0.0
        %907 = vmatpush.msra.mxu0 0.0
        %908 = vmatpush.msra.mxu0 0.0
        %909 = vmatpush.msra.mxu0 0.0
        %910 = vmatpush.msra.mxu0 0.0
        %911 = vmatpush.msra.mxu0 0.0
        %912 = vmatpush.msra.mxu0 0.0
        %913 = vmatpush.msra.mxu0 0.0
        %914 = vmatpush.msra.mxu0 0.0
        %915 = vmatpush.msra.mxu0 0.0
        %916 = vmatpush.msra.mxu0 0.0
        %917 = vmatpush.msra.mxu0 0.0
        %918 = vmatpush.msra.mxu0 0.0
        %919 = vmatpush.msra.mxu0 0.0
        %920 = vmatpush.msra.mxu0 0.0
        %921 = vmatpush.msra.mxu0 %v901
        %922 = vmatmul.f32.gmra.mxu0 %v904
        %v923 = vpop.f32.mrf.mxu0
        %v924 = vadd.f32 0.0, %v923
        %925 = vdwg.mxu0
        %926 = vrot.lane.b32.xlu0 %v639, 104
        %v927 = vpop.permute.xlu0 %926
        %928 = vrot.lane.b32.xlu0 %v664, 104
        %v929 = vpop.permute.xlu0 %928
        %v930 = vsel %vm692, %v927, 0
        %v932 = vsel %vm692, %v929, 0
        %934 = vmatpush.xpose.msra.mxu0 0.0
        %935 = vmatpush.xpose.msra.mxu0 0.0
        %936 = vmatpush.xpose.msra.mxu0 0.0
        %937 = vmatpush.xpose.msra.mxu0 0.0
        %938 = vmatpush.xpose.msra.mxu0 0.0
        %939 = vmatpush.xpose.msra.mxu0 0.0
        %940 = vmatpush.xpose.msra.mxu0 0.0
        %941 = vmatpush.xpose.msra.mxu0 0.0
        %942 = vmatpush.xpose.msra.mxu0 0.0
        %943 = vmatpush.xpose.msra.mxu0 0.0
        %944 = vmatpush.xpose.msra.mxu0 0.0
        %945 = vmatpush.xpose.msra.mxu0 0.0
        %946 = vmatpush.xpose.msra.mxu0 0.0
        %947 = vmatpush.xpose.msra.mxu0 0.0
        %948 = vmatpush.xpose.msra.mxu0 0.0
        %949 = vmatpush.xpose.msra.mxu0 %v932
        %950 = vmatmul.f32.gmra.mxu0 %v930
        %v951 = vpop.f32.mrf.mxu0
        %v952 = vadd.f32 0.0, %v951
        %953 = vdwg.mxu0
        %v954 = vsel %vm591, -1e+09, %v952
        %v955 = vsel %vm692, %v954, -inf
        %956 = vmax.xlane.f32.xlu0 %v955
        %v957 = vpop.xlane.xlu0 %956
        %v958 = vsub.f32 %v954, %v957
        %v959 = vmul.f32 %v958, 1.442695
        %v960 = vpow.pop %v959
        %v961 = vsel %vm692, %v960, 0.0
        %962 = vadd.xlane.f32.xlu0 %v961
        %v963 = vpop.xlane.xlu0 %962
        %v964 = vrcp.pop %v963
        %v965 = vmul.f32 %v963, %v964
        %v966 = vsub.f32 1.0, %v965
        %v967 = vmul.f32 %v964, %v966
        %v968 = vadd.f32 %v964, %v967
        %vm969 = vweird.f32 %v963
        %vm970 = vweird.f32 %v964
        %vm971 = vmor %vm969, %vm970
        %v972 = vsel %vm971, %v964, %v968
        %v973 = vand.u32 2147483647, %v963
        %vm974 = vcmp.eq.f32.partialorder %v973, 8.507059e+37
        %v975 = vand.u32 %v963, 2147483648
        %v976 = vor.u32 1.1754944e-38, %v975
        %v977 = vsel %vm974, %v976, %v972
        %v978 = vmul.f32 %v960, %v977
        %979 = vrot.lane.b32.xlu0 %v690, 104
        %v980 = vpop.permute.xlu0 %979
        %v983 = vsel %vm692, %v978, 0
        %985 = vmatpush.msra.mxu0 0.0
        %986 = vmatpush.msra.mxu0 0.0
        %987 = vmatpush.msra.mxu0 0.0
        %988 = vmatpush.msra.mxu0 0.0
        %989 = vmatpush.msra.mxu0 0.0
        %990 = vmatpush.msra.mxu0 0.0
        %991 = vmatpush.msra.mxu0 0.0
        %992 = vmatpush.msra.mxu0 0.0
        %993 = vmatpush.msra.mxu0 0.0
        %994 = vmatpush.msra.mxu0 0.0
        %995 = vmatpush.msra.mxu0 0.0
        %996 = vmatpush.msra.mxu0 0.0
        %997 = vmatpush.msra.mxu0 0.0
        %998 = vmatpush.msra.mxu0 0.0
        %999 = vmatpush.msra.mxu0 0.0
        %1000 = vmatpush.msra.mxu0 %v980
        %1001 = vmatmul.f32.gmra.mxu0 %v983
        %v1002 = vpop.f32.mrf.mxu0
        %v1003 = vadd.f32 0.0, %v1002
        %1004 = vdwg.mxu0
        %1006 = vrot.lane.b32.xlu0 %v845, 8
        %v1007 = vpop.permute.xlu0 %1006
        %1010 = vrot.lane.b32.xlu0 %v924, 16
        %v1011 = vpop.permute.xlu0 %1010
        %1014 = vrot.lane.b32.xlu0 %v1003, 24
        %v1015 = vpop.permute.xlu0 %1014
        %v1017 = vsel %vm692, %v765, %v1007
        %vm1018 = vcmask 130048
        %v1019 = vsel %vm1018, %v1017, %v1011
        %vm1020 = vcmask 195584
        %v1021 = vsel %vm1020, %v1019, %v1015
        %v1023 = vperm.slane %v611, 0
        %v1026 = vsel %vm615, %v1021, 0
        %1028 = vmatpush.msra.mxu0 0.0
        %1029 = vmatpush.msra.mxu0 0.0
        %1030 = vmatpush.msra.mxu0 0.0
        %1031 = vmatpush.msra.mxu0 0.0
        %1032 = vmatpush.msra.mxu0 0.0
        %1033 = vmatpush.msra.mxu0 0.0
        %1034 = vmatpush.msra.mxu0 0.0
        %1035 = vmatpush.msra.mxu0 0.0
        %1036 = vmatpush.msra.mxu0 0.0
        %1037 = vmatpush.msra.mxu0 0.0
        %1038 = vmatpush.msra.mxu0 0.0
        %1039 = vmatpush.msra.mxu0 0.0
        %1040 = vmatpush.msra.mxu0 %v607
        %1041 = vmatpush.msra.mxu0 %v606
        %1042 = vmatpush.msra.mxu0 %v605
        %1043 = vmatpush.msra.mxu0 %v604
        %1044 = vmatmul.f32.gmra.mxu0 %v1026
        %v1045 = vpop.f32.mrf.mxu0
        %v1046 = vadd.f32 %v1023, %v1045
        %1047 = vdwg.mxu0
        %1048 = vst.msk [vmem:[%s586] sm:$0xff] %vm615, %v1046
        %s1049 = sand.u32 %s310, 1
        %s1050 = scalar_lea.sflag [#allocation4], %s1049
        %s1051 = sand.u32 %s310, 1
        %s1052 = smul.addr %s1051, 8
        %s1053 = scalar_lea.vmem [#allocation16], %s1052
        // Predicated region
        $region101: #{tpu_custom_call.1} parent=67 // pred_check
          %p1054 = pneg %p320
        $region102: #{tpu_custom_call.1} parent=67 // pred_check_branch
          %1056 = sbr.rel (%p1054) target = $region104
        $region103: #{tpu_custom_call.1} parent=67 // pred_region
          %1058 = vsyncadd %s1050, 0
          %s1059 = smul.addr %s35, 8
          %s1060 = scalar_lea.hbm %s12, %s1059
          %s1062 = sshll.u32 %s1053, 4
          %s1063 = int_to_ptr.vmem [resolvable:$true] %s1062
          %s1064 = sshll.u32 %s1060, 4
          %s1065 = int_to_ptr.hbm [resolvable:$true] %s1064
          %1067 = dma.vmem_to_hbm [thread:$0]  %s1063, 128, %s1065, %s1050
        $region104: #{tpu_custom_call.1} parent=67 // pred_fallthru
          _
      $region68: #{tpu_custom_call.1} parent=5 // pred_fallthru
        _
      %p1068 = scmp.le.s32.totalorder 2, %s30
      // Predicated region
      $region105: #{tpu_custom_call.1} parent=5 // pred_check
        %p1069 = pneg %p1068
      $region106: #{tpu_custom_call.1} parent=5 // pred_check_branch
        %1071 = sbr.rel (%p1069) target = $region108
      $region107: #{tpu_custom_call.1} parent=5 // pred_region
        %s1072 = ssub.s32 %s30, 2
        // Predicated region
        $region109: #{tpu_custom_call.1} parent=107 // pred_check
          %p1073 = pneg %p326
        $region110: #{tpu_custom_call.1} parent=107 // pred_check_branch
          %1075 = sbr.rel (%p1073) target = $region112
        $region111: #{tpu_custom_call.1} parent=107 // pred_region
          %s1076 = sand.u32 %s311, 1
          %s1077 = scalar_lea.sflag [#allocation4], %s1076
          %s1078 = sand.u32 %s311, 1
          %s1079 = smul.addr %s1078, 8
          %s1080 = scalar_lea.vmem [#allocation16], %s1079
          %1082 = dma.done %s1077, 128
        $region112: #{tpu_custom_call.1} parent=107 // pred_fallthru
          _
      $region108: #{tpu_custom_call.1} parent=5 // pred_fallthru
        _
    $region6: #{tpu_custom_call.1} parent=1 // loop_footer
      %s34 = sadd.s32 1, %s30
    $region7: #{tpu_custom_call.1} parent=1 // loop_footer_branch
      %29 = sbr.rel target = $region3
    $region8: #{tpu_custom_call.1} parent=1 // loop_exit
      _
    %1083 = vsyncpa [#allocation3], 1
    %s1084 = scalar_lea.sflag [#allocation3], 1
    %1085 = vsyncpa %s1084, 1
    %1086 = vsyncpa [#allocation6], 1
    %s1087 = scalar_lea.sflag [#allocation6], 1
    %1088 = vsyncpa %s1087, 1
    %1089 = vsyncpa [#allocation9], 1
    %1090 = vsyncpa [#allocation12], 1
    %1091 = vsyncpa [#allocation15], 1
    %1092 = vsyncpa [#allocation4], 1
    %s1093 = scalar_lea.sflag [#allocation4], 1
    %1094 = vsyncpa %s1093, 1

</llo_original>
